<compile_context>
chip_gen: v7x
topology: tpu7x:2x2x1
jax: 0.10.0
libtpu: 0.0.40
codegen_flags: <defaults>
</compile_context>

<pallas_src>
import functools
import math

import jax
import jax.numpy as jnp
import numpy as np
from jax import lax
from jax.experimental import pallas as pl
from jax.experimental.pallas import tpu as pltpu


# dot_general dimension numbers: contract the LAST dim of both operands
# ("trans_b" matmul - the canonical well-supported Mosaic pattern).
_TRANS_B = (((1,), (1,)), ((), ()))


# ----------------------------------------------------------------------------
# Kernel A: fused (outer Linear o MHA in-proj) projections, lane-dense matmuls.
# Writes the projected activations TRANSPOSED, (E, L), so the attention kernel
# can slice heads on the sublane axis via BlockSpec.
# ----------------------------------------------------------------------------
def _proj_kernel(q_ref, k_ref, v_ref,                       # (1,Lq,Dq) (1,Lk,Dk) (1,Lv,Dv) bf16
                 wtq_ref, btq_ref,                           # (E,Dq) bf16, (E,1) f32
                 wtk_ref, btk_ref,                           # (E,Dk) bf16, (E,1) f32
                 wtv_ref, btv_ref,                           # (E,Dv) bf16, (E,1) f32
                 qT_ref, kT_ref, vT_ref):                    # (1,E,Lq) (1,E,Lk) (1,E,Lk) f32
    f32 = jnp.float32

    def project(x_ref, wt_ref, bt_ref, o_ref):
        # (E, Din) . (L, Din)^T -> (E, L): full-width, no per-head padding.
        # bf16 MXU operands, f32 accumulation.
        y = lax.dot_general(wt_ref[...], x_ref[0], _TRANS_B,
                            preferred_element_type=f32)
        o_ref[0] = y + bt_ref[...]                           # (E,1) broadcasts over lanes

    project(q_ref, wtq_ref, btq_ref, qT_ref)
    project(k_ref, wtk_ref, btk_ref, kT_ref)
    project(v_ref, wtv_ref, btv_ref, vT_ref)


# ----------------------------------------------------------------------------
# Kernel B: per-(batch, head) scaled dot-product attention + out-projection,
# with the head axis as an "arbitrary" reduction grid axis accumulated into a
# single f32 VMEM scratch (no (H, Lq, Ep) intermediate, no concat).
# ----------------------------------------------------------------------------
def _attn_kernel(qT_ref, kT_ref, vT_ref,                     # (1,Dh,Lq) (1,Dh,Lk) (1,Dh,Lk) f32
                 wo_ref, bo_ref,                              # (1,Dh,Ep) bf16, (1,Ep) f32
                 o_ref,                                       # (1,Lq,Ep) f32
                 acc_ref,                                     # (Lq,Ep)   f32 scratch
                 *, num_heads: int):
    f32, bf16 = jnp.float32, jnp.bfloat16
    h = pl.program_id(1)

    @pl.when(h == 0)
    def _():
        acc_ref[...] = jnp.zeros_like(acc_ref)

    q_h = qT_ref[0].T.astype(bf16)          # (Lq, Dh)  small 2-D (last-two-dims) transpose
    kT_h = kT_ref[0].astype(bf16)           # (Dh, Lk)
    vT_h = vT_ref[0].astype(bf16)           # (Dh, Lk)

    # Scores (1/sqrt(Dh) already folded into the fused Q weight/bias).
    s = jnp.dot(q_h, kT_h, preferred_element_type=f32)       # (Lq, Lk)
    s = s - jnp.max(s, axis=-1, keepdims=True)
    p = jnp.exp(s)
    # Approximate reciprocal (EUP slot): softmax rows sum to 1 +/- ~2^-12.
    p = p * pl.reciprocal(jnp.sum(p, axis=-1, keepdims=True), approx=True)

    # ctx_h = p @ v_h ; v arrives as (Dh, Lk) so contract the last dims.
    ctx = lax.dot_general(p.astype(bf16), vT_h, _TRANS_B,
                          preferred_element_type=f32)         # (Lq, Dh)

    # Out-projection contribution of this head, accumulated over the head axis.
    acc_ref[...] += jnp.dot(ctx.astype(bf16), wo_ref[0],
                            preferred_element_type=f32)       # (Lq, Ep)

    @pl.when(h == num_heads - 1)
    def _():
        o_ref[0] = acc_ref[...] + bo_ref[...]                 # lane-dense store

    # TODO(synk): for production Lq/Lk, add Lq ("parallel") and Lk ("arbitrary",
    # online-softmax) grid axes flash-attention style; padded keys must then be
    # masked before the max/sum.


# ----------------------------------------------------------------------------
# Wrapper-side weight preparation (pure precompute, could be done at load time)
# ----------------------------------------------------------------------------
def _prepare_params(params, num_heads):
    """Fold outer Linear + MHA in-proj into one (Din, E) weight per stream,
    fold in 1/sqrt(Dh), pre-transpose to (E, Din) for the trans_b matmul,
    split the out-projection per head, pad it to a 128-lane multiple only if
    needed, and cast MXU operands to bf16."""
    E = params["wiq"].shape[0]
    H = num_heads
    Dh = E // H
    Ep = E if E % 128 == 0 else ((E + 127) // 128) * 128
    scale = 1.0 / math.sqrt(Dh)

    def fuse_t(w_outer, b_outer, w_in, b_in, s=1.0):
        w = (w_outer @ w_in) * s                              # (Din, E) f32
        b = (b_outer @ w_in + b_in) * s                       # (1, E)   f32
        return (w.T.astype(jnp.bfloat16),                     # (E, Din) bf16
                b.T.astype(jnp.float32))                      # (E, 1)   f32

    wtq, btq = fuse_t(params["wqp"], params["bqp"], params["wiq"], params["biq"], scale)
    wtk, btk = fuse_t(params["wkp"], params["bkp"], params["wik"], params["bik"])
    wtv, btv = fuse_t(params["wvp"], params["bvp"], params["wiv"], params["biv"])

    wo = params["wo"]
    bo = params["bo"]
    if Ep != E:
        wo = jnp.zeros((E, Ep), jnp.float32).at[:, :E].set(wo)
        bo = jnp.zeros((1, Ep), jnp.float32).at[:, :E].set(bo)
    wo_h = wo.reshape(H, Dh, Ep).astype(jnp.bfloat16)         # (H, Dh, Ep)
    bo = bo.astype(jnp.float32)                               # (1, Ep)

    return (wtq, btq, wtk, btk, wtv, btv, wo_h, bo), Ep


# ----------------------------------------------------------------------------
# Wrapper
# ----------------------------------------------------------------------------
def cross_attention_forward(query, key, value, params, num_heads):
    B, Lq, Dq = query.shape
    _, Lk, Dk = key.shape
    _, Lv, Dv = value.shape
    E = params["wiq"].shape[0]
    assert E == Dq, "embed_dim must equal query_dim"
    assert E % num_heads == 0, "num_heads must divide embed_dim"
    Dh = E // num_heads
    assert Dh % 8 == 0, "head_dim must be a multiple of 8 (sublane BlockSpec view)"
    assert Lk == Lv, "key/value sequence lengths must match"

    prepped, Ep = _prepare_params(params, num_heads)
    wtq, btq, wtk, btk, wtv, btv, wo_h, bo = prepped

    # [review 8] halve activation DMA: feed bf16 into the projection kernel.
    qb = query.astype(jnp.bfloat16)
    kb = key.astype(jnp.bfloat16)
    vb = value.astype(jnp.bfloat16)

    def x_spec(L, D):
        return pl.BlockSpec((1, L, D), lambda b: (b, 0, 0))

    def w_spec(arr):
        # Constant block index -> the pipeline fetches it once.  For
        # production-sized E additionally pass pipeline_mode=pl.Buffered(1)
        # (single buffer) and set vmem_limit_bytes in CompilerParams (v7x has
        # 64 MiB physical / 32 MiB default scoped VMEM).
        nd = arr.ndim
        return pl.BlockSpec(arr.shape, lambda b, _nd=nd: (0,) * _nd)

    # ---- kernel A: fused projections, grid over batch -----------------------
    qT, kT, vT = pl.pallas_call(
        _proj_kernel,
        out_shape=(jax.ShapeDtypeStruct((B, E, Lq), jnp.float32),
                   jax.ShapeDtypeStruct((B, E, Lk), jnp.float32),
                   jax.ShapeDtypeStruct((B, E, Lk), jnp.float32)),
        grid_spec=pltpu.PrefetchScalarGridSpec(
            num_scalar_prefetch=0,
            grid=(B,),
            in_specs=[x_spec(Lq, Dq), x_spec(Lk, Dk), x_spec(Lv, Dv),
                      w_spec(wtq), w_spec(btq),
                      w_spec(wtk), w_spec(btk),
                      w_spec(wtv), w_spec(btv)],
            out_specs=(pl.BlockSpec((1, E, Lq), lambda b: (b, 0, 0)),
                       pl.BlockSpec((1, E, Lk), lambda b: (b, 0, 0)),
                       pl.BlockSpec((1, E, Lk), lambda b: (b, 0, 0))),
        ),
        compiler_params=pltpu.CompilerParams(
            dimension_semantics=("parallel",)),
    )(qb, kb, vb, wtq, btq, wtk, btk, wtv, btv)

    # ---- kernel B: attention + accumulated out-projection, grid (B, H) ------
    kernel_b = functools.partial(_attn_kernel, num_heads=num_heads)
    out = pl.pallas_call(
        kernel_b,
        out_shape=jax.ShapeDtypeStruct((B, Lq, Ep), jnp.float32),
        grid_spec=pltpu.PrefetchScalarGridSpec(
            num_scalar_prefetch=0,
            grid=(B, num_heads),                      # head axis = reduction, last
            in_specs=[
                pl.BlockSpec((1, Dh, Lq), lambda b, h: (b, h, 0)),   # head view of qT
                pl.BlockSpec((1, Dh, Lk), lambda b, h: (b, h, 0)),   # head view of kT
                pl.BlockSpec((1, Dh, Lk), lambda b, h: (b, h, 0)),   # head view of vT
                pl.BlockSpec((1, Dh, Ep), lambda b, h: (h, 0, 0)),   # head slab of Wo
                pl.BlockSpec((1, Ep), lambda b, h: (0, 0)),          # bo (constant)
            ],
            out_specs=pl.BlockSpec((1, Lq, Ep), lambda b, h: (b, 0, 0)),
            scratch_shapes=[pltpu.VMEM((Lq, Ep), jnp.float32)],
        ),
        compiler_params=pltpu.CompilerParams(
            dimension_semantics=("parallel", "arbitrary")),
    )(qT, kT, vT, wo_h, bo)

    # [review 9] slice only when lane padding was actually added.
    if Ep != E:
        out = out[:, :, :E]
    return out


# ----------------------------------------------------------------------------
# References
# ----------------------------------------------------------------------------
def reference_forward(query, key, value, params, num_heads):
    """Pure f32 JAX mirror of the PyTorch module forward (eval mode)."""
    q = query @ params["wqp"] + params["bqp"]
    k = key @ params["wkp"] + params["bkp"]
    v = value @ params["wvp"] + params["bvp"]

    qh = q @ params["wiq"] + params["biq"]
    kh = k @ params["wik"] + params["bik"]
    vh = v @ params["wiv"] + params["biv"]

    B, Lq, E = qh.shape
    Lk = kh.shape[1]
    Dh = E // num_heads
    qh = qh.reshape(B, Lq, num_heads, Dh).transpose(0, 2, 1, 3)
    kh = kh.reshape(B, Lk, num_heads, Dh).transpose(0, 2, 1, 3)
    vh = vh.reshape(B, Lk, num_heads, Dh).transpose(0, 2, 1, 3)

    s = jnp.einsum("bhqd,bhkd->bhqk", qh, kh) / math.sqrt(Dh)
    p = jax.nn.softmax(s, axis=-1)
    ctx = jnp.einsum("bhqk,bhkd->bhqd", p, vh)
    ctx = ctx.transpose(0, 2, 1, 3).reshape(B, Lq, E)
    return ctx @ params["wo"] + params["bo"]


def reference_forward_prepared(query, key, value, prepped, num_heads, E):
    """Plain-JAX replica of the kernel math (same fused weights and bf16
    operand rounding) for a tight numerical check."""
    wtq, btq, wtk, btk, wtv, btv, wo_h, bo = prepped
    f32, bf16 = jnp.float32, jnp.bfloat16
    H = num_heads
    Dh = E // H

    def proj(x, wt, bt):
        return jnp.einsum("ed,bld->bel", wt, x.astype(bf16),
                          preferred_element_type=f32) + bt    # (B, E, L)

    qT = proj(query, wtq, btq)
    kT = proj(key, wtk, btk)
    vT = proj(value, wtv, btv)

    B, _, Lq = qT.shape
    Lk = kT.shape[-1]
    qTh = qT.reshape(B, H, Dh, Lq).astype(bf16)
    kTh = kT.reshape(B, H, Dh, Lk).astype(bf16)
    vTh = vT.reshape(B, H, Dh, Lk).astype(bf16)

    s = jnp.einsum("bhdq,bhdk->bhqk", qTh, kTh, preferred_element_type=f32)
    p = jax.nn.softmax(s, axis=-1)
    ctx = jnp.einsum("bhqk,bhdk->bhqd", p.astype(bf16), vTh,
                     preferred_element_type=f32)
    out = jnp.einsum("bhqd,hdo->bqo", ctx.astype(bf16), wo_h,
                     preferred_element_type=f32) + bo
    return out[:, :, :E]


# ----------------------------------------------------------------------------
# Deterministic parameter init + driver
# ----------------------------------------------------------------------------
def init_params(key, query_dim, key_dim, value_dim):
    E = query_dim
    ks = jax.random.split(key, 14)

    def w(k, shape, fan_in):
        return jax.random.normal(k, shape, jnp.float32) / math.sqrt(fan_in)

    def b(k, shape):
        return 0.01 * jax.random.normal(k, shape, jnp.float32)

    return {
        # outer projections (stored (in, out))
        "wqp": w(ks[0], (query_dim, E), query_dim), "bqp": b(ks[1], (1, E)),
        "wkp": w(ks[2], (key_dim, E), key_dim),     "bkp": b(ks[3], (1, E)),
        "wvp": w(ks[4], (value_dim, E), value_dim), "bvp": b(ks[5], (1, E)),
        # MHA in-projections
        "wiq": w(ks[6], (E, E), E),  "biq": b(ks[7], (1, E)),
        "wik": w(ks[8], (E, E), E),  "bik": b(ks[9], (1, E)),
        "wiv": w(ks[10], (E, E), E), "biv": b(ks[11], (1, E)),
        # MHA out-projection
        "wo": w(ks[12], (E, E), E),  "bo": b(ks[13], (1, E)),
    }


if __name__ == "__main__":
    B = 2
    Lq = 16          # query sequence length
    Lkv = 8          # key/value sequence length
    query_dim = 64   # embed_dim; num_heads=8 -> head_dim=8 (sublane aligned)
    key_dim = 48
    value_dim = 40
    num_heads = 8

    root = jax.random.PRNGKey(0)
    k_q, k_k, k_v, k_p = jax.random.split(root, 4)

    query = jax.random.normal(k_q, (B, Lq, query_dim), jnp.float32)
    key = jax.random.normal(k_k, (B, Lkv, key_dim), jnp.float32)
    value = jax.random.normal(k_v, (B, Lkv, value_dim), jnp.float32)
    params = init_params(k_p, query_dim, key_dim, value_dim)

    out = jax.block_until_ready(
        cross_attention_forward(query, key, value, params, num_heads))

    # Tight check vs a plain-JAX replica of the kernel math (same fused weights
    # and bf16 operand rounding); slack covers the approx reciprocal.
    prepped, _ = _prepare_params(params, num_heads)
    ref_bf16 = jax.block_until_ready(
        reference_forward_prepared(query, key, value, prepped, num_heads,
                                   query_dim))
    np.testing.assert_allclose(np.asarray(out), np.asarray(ref_bf16),
                               rtol=1e-2, atol=1e-2)

    # Fidelity check vs the f32 PyTorch-module semantics; tolerance budget is
    # the bf16 rounding of the MXU operands.
    ref_f32 = jax.block_until_ready(
        reference_forward(query, key, value, params, num_heads))
    np.testing.assert_allclose(np.asarray(out), np.asarray(ref_f32),
                               rtol=5e-2, atol=5e-2)

    print("KERNEL_OK")
</pallas_src>

<mosaic_0001>
module attributes {stable_mosaic.version = 11 : i64} {
  func.func @_proj_kernel(%arg0: i32, %arg1: memref<1x16x64xbf16, #tpu.memory_space<vmem>>, %arg2: memref<1x8x48xbf16, #tpu.memory_space<vmem>>, %arg3: memref<1x8x40xbf16, #tpu.memory_space<vmem>>, %arg4: memref<64x64xbf16, #tpu.memory_space<vmem>>, %arg5: memref<64x1xf32, #tpu.memory_space<vmem>>, %arg6: memref<64x48xbf16, #tpu.memory_space<vmem>>, %arg7: memref<64x1xf32, #tpu.memory_space<vmem>>, %arg8: memref<64x40xbf16, #tpu.memory_space<vmem>>, %arg9: memref<64x1xf32, #tpu.memory_space<vmem>>, %arg10: memref<1x64x16xf32, #tpu.memory_space<vmem>>, %arg11: memref<1x64x8xf32, #tpu.memory_space<vmem>>, %arg12: memref<1x64x8xf32, #tpu.memory_space<vmem>>) attributes {dimension_semantics = [#tpu.dimension_semantics<parallel>], iteration_bounds = array<i64: 2>, scalar_prefetch = 0 : i64, scratch_operands = 0 : i64, tpu.core_type = #tpu.core_type<tc>, window_params = [{transform_indices = @transform_0, window_bounds = array<i64: 1, 16, 64>}, {transform_indices = @transform_1, window_bounds = array<i64: 1, 8, 48>}, {transform_indices = @transform_2, window_bounds = array<i64: 1, 8, 40>}, {pipeline_mode = #tpu.pipeline_mode<synchronous>, transform_indices = @transform_3, window_bounds = array<i64: 64, 64>}, {pipeline_mode = #tpu.pipeline_mode<synchronous>, transform_indices = @transform_4, window_bounds = array<i64: 64, 1>}, {pipeline_mode = #tpu.pipeline_mode<synchronous>, transform_indices = @transform_5, window_bounds = array<i64: 64, 48>}, {pipeline_mode = #tpu.pipeline_mode<synchronous>, transform_indices = @transform_6, window_bounds = array<i64: 64, 1>}, {pipeline_mode = #tpu.pipeline_mode<synchronous>, transform_indices = @transform_7, window_bounds = array<i64: 64, 40>}, {pipeline_mode = #tpu.pipeline_mode<synchronous>, transform_indices = @transform_8, window_bounds = array<i64: 64, 1>}, {transform_indices = @transform_9, window_bounds = array<i64: 1, 64, 16>}, {transform_indices = @transform_10, window_bounds = array<i64: 1, 64, 8>}, {transform_indices = @transform_11, window_bounds = array<i64: 1, 64, 8>}]} {
    %c0 = arith.constant 0 : index
    %c0_0 = arith.constant 0 : index
    %0 = vector.load %arg4[%c0, %c0_0] : memref<64x64xbf16, #tpu.memory_space<vmem>>, vector<64x64xbf16>
    %c0_1 = arith.constant 0 : index
    %c0_2 = arith.constant 0 : index
    %c0_3 = arith.constant 0 : index
    %1 = vector.load %arg1[%c0_1, %c0_2, %c0_3] : memref<1x16x64xbf16, #tpu.memory_space<vmem>>, vector<1x16x64xbf16>
    %2 = vector.shape_cast %1 : vector<1x16x64xbf16> to vector<16x64xbf16>
    %cst = arith.constant dense<0.000000e+00> : vector<64x16xf32>
    %3 = tpu.matmul %0, %2, %cst {dimension_numbers = #tpu.dot_dimension_numbers<[1], [1], [0], [0], [0, 0, 1, 0], [], []>} : vector<64x64xbf16>, vector<16x64xbf16>, vector<64x16xf32> -> vector<64x16xf32>
    %c0_4 = arith.constant 0 : index
    %c0_5 = arith.constant 0 : index
    %4 = vector.load %arg5[%c0_4, %c0_5] : memref<64x1xf32, #tpu.memory_space<vmem>>, vector<64x1xf32>
    %5 = vector.broadcast %4 : vector<64x1xf32> to vector<64x16xf32>
    %6 = arith.addf %3, %5 : vector<64x16xf32>
    %c0_6 = arith.constant 0 : index
    %c0_7 = arith.constant 0 : index
    %c0_8 = arith.constant 0 : index
    %7 = vector.load %arg10[%c0_6, %c0_7, %c0_8] : memref<1x64x16xf32, #tpu.memory_space<vmem>>, vector<1x64x16xf32>
    %8 = vector.shape_cast %7 : vector<1x64x16xf32> to vector<64x16xf32>
    %9 = vector.shape_cast %6 : vector<64x16xf32> to vector<1x64x16xf32>
    tpu.vector_store %arg10[%c0_6, %c0_7, %c0_8], %9 {strides = array<i32>} : memref<1x64x16xf32, #tpu.memory_space<vmem>>, vector<1x64x16xf32>,
    %c0_9 = arith.constant 0 : index
    %c0_10 = arith.constant 0 : index
    %10 = vector.load %arg6[%c0_9, %c0_10] : memref<64x48xbf16, #tpu.memory_space<vmem>>, vector<64x48xbf16>
    %c0_11 = arith.constant 0 : index
    %c0_12 = arith.constant 0 : index
    %c0_13 = arith.constant 0 : index
    %11 = vector.load %arg2[%c0_11, %c0_12, %c0_13] : memref<1x8x48xbf16, #tpu.memory_space<vmem>>, vector<1x8x48xbf16>
    %12 = vector.shape_cast %11 : vector<1x8x48xbf16> to vector<8x48xbf16>
    %cst_14 = arith.constant dense<0.000000e+00> : vector<64x8xf32>
    %13 = tpu.matmul %10, %12, %cst_14 {dimension_numbers = #tpu.dot_dimension_numbers<[1], [1], [0], [0], [0, 0, 1, 0], [], []>} : vector<64x48xbf16>, vector<8x48xbf16>, vector<64x8xf32> -> vector<64x8xf32>
    %c0_15 = arith.constant 0 : index
    %c0_16 = arith.constant 0 : index
    %14 = vector.load %arg7[%c0_15, %c0_16] : memref<64x1xf32, #tpu.memory_space<vmem>>, vector<64x1xf32>
    %15 = vector.broadcast %14 : vector<64x1xf32> to vector<64x8xf32>
    %16 = arith.addf %13, %15 : vector<64x8xf32>
    %c0_17 = arith.constant 0 : index
    %c0_18 = arith.constant 0 : index
    %c0_19 = arith.constant 0 : index
    %17 = vector.load %arg11[%c0_17, %c0_18, %c0_19] : memref<1x64x8xf32, #tpu.memory_space<vmem>>, vector<1x64x8xf32>
    %18 = vector.shape_cast %17 : vector<1x64x8xf32> to vector<64x8xf32>
    %19 = vector.shape_cast %16 : vector<64x8xf32> to vector<1x64x8xf32>
    tpu.vector_store %arg11[%c0_17, %c0_18, %c0_19], %19 {strides = array<i32>} : memref<1x64x8xf32, #tpu.memory_space<vmem>>, vector<1x64x8xf32>,
    %c0_20 = arith.constant 0 : index
    %c0_21 = arith.constant 0 : index
    %20 = vector.load %arg8[%c0_20, %c0_21] : memref<64x40xbf16, #tpu.memory_space<vmem>>, vector<64x40xbf16>
    %c0_22 = arith.constant 0 : index
    %c0_23 = arith.constant 0 : index
    %c0_24 = arith.constant 0 : index
    %21 = vector.load %arg3[%c0_22, %c0_23, %c0_24] : memref<1x8x40xbf16, #tpu.memory_space<vmem>>, vector<1x8x40xbf16>
    %22 = vector.shape_cast %21 : vector<1x8x40xbf16> to vector<8x40xbf16>
    %cst_25 = arith.constant dense<0.000000e+00> : vector<64x8xf32>
    %23 = tpu.matmul %20, %22, %cst_25 {dimension_numbers = #tpu.dot_dimension_numbers<[1], [1], [0], [0], [0, 0, 1, 0], [], []>} : vector<64x40xbf16>, vector<8x40xbf16>, vector<64x8xf32> -> vector<64x8xf32>
    %c0_26 = arith.constant 0 : index
    %c0_27 = arith.constant 0 : index
    %24 = vector.load %arg9[%c0_26, %c0_27] : memref<64x1xf32, #tpu.memory_space<vmem>>, vector<64x1xf32>
    %25 = vector.broadcast %24 : vector<64x1xf32> to vector<64x8xf32>
    %26 = arith.addf %23, %25 : vector<64x8xf32>
    %c0_28 = arith.constant 0 : index
    %c0_29 = arith.constant 0 : index
    %c0_30 = arith.constant 0 : index
    %27 = vector.load %arg12[%c0_28, %c0_29, %c0_30] : memref<1x64x8xf32, #tpu.memory_space<vmem>>, vector<1x64x8xf32>
    %28 = vector.shape_cast %27 : vector<1x64x8xf32> to vector<64x8xf32>
    %29 = vector.shape_cast %26 : vector<64x8xf32> to vector<1x64x8xf32>
    tpu.vector_store %arg12[%c0_28, %c0_29, %c0_30], %29 {strides = array<i32>} : memref<1x64x8xf32, #tpu.memory_space<vmem>>, vector<1x64x8xf32>,
    return
  }
  func.func @transform_0(%arg0: i32) -> (i32, i32, i32) {
    %c0_i32 = arith.constant 0 : i32
    %c0_i32_0 = arith.constant 0 : i32
    %c0_i32_1 = arith.constant 0 : i32
    return %arg0, %c0_i32, %c0_i32_0 : i32, i32, i32
  }
  func.func @transform_1(%arg0: i32) -> (i32, i32, i32) {
    %c0_i32 = arith.constant 0 : i32
    %c0_i32_0 = arith.constant 0 : i32
    %c0_i32_1 = arith.constant 0 : i32
    return %arg0, %c0_i32, %c0_i32_0 : i32, i32, i32
  }
  func.func @transform_2(%arg0: i32) -> (i32, i32, i32) {
    %c0_i32 = arith.constant 0 : i32
    %c0_i32_0 = arith.constant 0 : i32
    %c0_i32_1 = arith.constant 0 : i32
    return %arg0, %c0_i32, %c0_i32_0 : i32, i32, i32
  }
  func.func @transform_3(%arg0: i32) -> (i32, i32) {
    %c0_i32 = arith.constant 0 : i32
    %c0_i32_0 = arith.constant 0 : i32
    %c0_i32_1 = arith.constant 0 : i32
    return %c0_i32, %c0_i32_0 : i32, i32
  }
  func.func @transform_4(%arg0: i32) -> (i32, i32) {
    %c0_i32 = arith.constant 0 : i32
    %c0_i32_0 = arith.constant 0 : i32
    %c0_i32_1 = arith.constant 0 : i32
    return %c0_i32, %c0_i32_0 : i32, i32
  }
  func.func @transform_5(%arg0: i32) -> (i32, i32) {
    %c0_i32 = arith.constant 0 : i32
    %c0_i32_0 = arith.constant 0 : i32
    %c0_i32_1 = arith.constant 0 : i32
    return %c0_i32, %c0_i32_0 : i32, i32
  }
  func.func @transform_6(%arg0: i32) -> (i32, i32) {
    %c0_i32 = arith.constant 0 : i32
    %c0_i32_0 = arith.constant 0 : i32
    %c0_i32_1 = arith.constant 0 : i32
    return %c0_i32, %c0_i32_0 : i32, i32
  }
  func.func @transform_7(%arg0: i32) -> (i32, i32) {
    %c0_i32 = arith.constant 0 : i32
    %c0_i32_0 = arith.constant 0 : i32
    %c0_i32_1 = arith.constant 0 : i32
    return %c0_i32, %c0_i32_0 : i32, i32
  }
  func.func @transform_8(%arg0: i32) -> (i32, i32) {
    %c0_i32 = arith.constant 0 : i32
    %c0_i32_0 = arith.constant 0 : i32
    %c0_i32_1 = arith.constant 0 : i32
    return %c0_i32, %c0_i32_0 : i32, i32
  }
  func.func @transform_9(%arg0: i32) -> (i32, i32, i32) {
    %c0_i32 = arith.constant 0 : i32
    %c0_i32_0 = arith.constant 0 : i32
    %c0_i32_1 = arith.constant 0 : i32
    return %arg0, %c0_i32, %c0_i32_0 : i32, i32, i32
  }
  func.func @transform_10(%arg0: i32) -> (i32, i32, i32) {
    %c0_i32 = arith.constant 0 : i32
    %c0_i32_0 = arith.constant 0 : i32
    %c0_i32_1 = arith.constant 0 : i32
    return %arg0, %c0_i32, %c0_i32_0 : i32, i32, i32
  }
  func.func @transform_11(%arg0: i32) -> (i32, i32, i32) {
    %c0_i32 = arith.constant 0 : i32
    %c0_i32_0 = arith.constant 0 : i32
    %c0_i32_1 = arith.constant 0 : i32
    return %arg0, %c0_i32, %c0_i32_0 : i32, i32, i32
  }
}

</mosaic_0001>

<llo_original>
// kernel: tpu_custom_call.1
$region0: #{tpu_custom_call.1}
  #allocation0 [shape = 'u32[]', space=smem, size = 0x4, offset = 0x4, fixed_abs, tag = 'smem constant byte address 0x4 - core index']
  #allocation1 [shape = 'u32[144,128]{1,0:T(1,128)}', space=vmem, size = 0x12000, scoped, tag = 'internal scratch']
  %s0 = inlined_call_operand.vmem [shape: bf16[2,16,64], index: 0, kind: input, shape index: {}]
  %s1 = inlined_call_operand.vmem [shape: bf16[2,8,48], index: 1, kind: input, shape index: {}]
  %s2 = inlined_call_operand.vmem [shape: bf16[2,8,40], index: 2, kind: input, shape index: {}]
  %s3 = inlined_call_operand.vmem [shape: bf16[64,64], index: 3, kind: input, shape index: {}]
  %s4 = inlined_call_operand.vmem [shape: f32[64,1], index: 4, kind: input, shape index: {}]
  %s5 = inlined_call_operand.vmem [shape: bf16[64,48], index: 5, kind: input, shape index: {}]
  %s6 = inlined_call_operand.vmem [shape: f32[64,1], index: 6, kind: input, shape index: {}]
  %s7 = inlined_call_operand.vmem [shape: bf16[64,40], index: 7, kind: input, shape index: {}]
  %s8 = inlined_call_operand.vmem [shape: f32[64,1], index: 8, kind: input, shape index: {}]
  %s9 = inlined_call_operand.vmem [shape: f32[2,64,16], index: 9, kind: output, shape index: {0}]
  %s10 = inlined_call_operand.vmem [shape: f32[2,64,8], index: 10, kind: output, shape index: {1}]
  %s11 = inlined_call_operand.vmem [shape: f32[2,64,8], index: 11, kind: output, shape index: {2}]
  %12 = xla_tuple %s9, %s10, %s11
  %s13 = sld [smem:[#allocation0]]
  $region85: #{tpu_custom_call.1} parent=0
    _
  %s15 = ssub.s32 1, %s13
  %s16 = scalar_select 0, %s15, %s13
  loop: start=0, step=1, limit=4
  $region2: #{tpu_custom_call.1} parent=0 // loop_pre_header
    _
  $region3: #{tpu_custom_call.1} parent=0 // loop_header
    %s18 = sphi 0, %s22
    %p19 = scmp.ge.s32.totalorder %s18, 4
    %s28 = sphi 0, %s30
    %s31 = sphi 0, %s28
    %s32 = sphi 0, %s31
    %s48 = sphi 0, %s32
    %s54 = sphi 0, %s56
    %s57 = sphi 0, %s54
    %s58 = sphi 0, %s57
    %s74 = sphi 0, %s58
    %s80 = sphi 0, %s82
    %s83 = sphi 0, %s80
    %s84 = sphi 0, %s83
    %s100 = sphi 0, %s84
    %s104 = sphi 0, %s104
    %s106 = sphi 0, %s104
    %s107 = sphi 0, %s106
    %s121 = sphi 0, %s107
    %s125 = sphi 0, %s125
    %s127 = sphi 0, %s125
    %s128 = sphi 0, %s127
    %s142 = sphi 0, %s128
    %s146 = sphi 0, %s146
    %s148 = sphi 0, %s146
    %s149 = sphi 0, %s148
    %s163 = sphi 0, %s149
    %s167 = sphi 0, %s167
    %s169 = sphi 0, %s167
    %s170 = sphi 0, %s169
    %s184 = sphi 0, %s170
    %s188 = sphi 0, %s188
    %s190 = sphi 0, %s188
    %s191 = sphi 0, %s190
    %s205 = sphi 0, %s191
    %s209 = sphi 0, %s209
    %s211 = sphi 0, %s209
    %s212 = sphi 0, %s211
    %s226 = sphi 0, %s212
    %s232 = sphi 0, %s234
    %s235 = sphi 0, %s232
    %s236 = sphi 0, %s235
    %s252 = sphi 0, %s236
    %s258 = sphi 0, %s260
    %s261 = sphi 0, %s258
    %s262 = sphi 0, %s261
    %s278 = sphi 0, %s262
    %s284 = sphi 0, %s286
    %s287 = sphi 0, %s284
    %s288 = sphi 0, %s287
    %s304 = sphi 0, %s288
  $region4: #{tpu_custom_call.1} parent=0 // loop_header_branch
    %21 = sbr.rel (%p19) target = $region8
  $region5: #{tpu_custom_call.1} parent=0 // loop_body
    %s23 = ssub.s32 %s18, 1
    %s24 = ssub.s32 %s18, 2
    %s25 = sadd.s32 %s18, 1
    %s26 = ssub.s32 %s18, %s25
    %p27 = scmp.eq.s32.totalorder %s26, 0
    %s29 = sadd.s32 %s28, 1
    %s30 = scalar_select %p27, %s28, %s29
    %p33 = pneg %p27
    %p34 = scmp.eq.s32.totalorder %s18, 1
    %p35 = por %p33, %p34
    %p36 = scmp.ne.s32.totalorder %s28, %s31
    %p37 = scmp.eq.s32.totalorder %s18, 0
    %p38 = por %p36, %p37
    %p39 = scmp.ne.s32.totalorder %s28, %s31
    %p40 = scmp.eq.s32.totalorder %s23, 1
    %p41 = por %p39, %p40
    %p42 = scmp.ne.s32.totalorder %s31, %s32
    %p43 = scmp.eq.s32.totalorder %s23, 0
    %p44 = por %p42, %p43
    %p45 = scmp.ne.s32.totalorder %s31, %s32
    %p46 = scmp.eq.s32.totalorder %s24, 1
    %p47 = por %p45, %p46
    %p49 = scmp.ne.s32.totalorder %s32, %s48
    %p50 = scmp.eq.s32.totalorder %s24, 0
    %p51 = por %p49, %p50
    %s52 = ssub.s32 %s18, %s25
    %p53 = scmp.eq.s32.totalorder %s52, 0
    %s55 = sadd.s32 %s54, 1
    %s56 = scalar_select %p53, %s54, %s55
    %p59 = pneg %p53
    %p60 = scmp.eq.s32.totalorder %s18, 1
    %p61 = por %p59, %p60
    %p62 = scmp.ne.s32.totalorder %s54, %s57
    %p63 = scmp.eq.s32.totalorder %s18, 0
    %p64 = por %p62, %p63
    %p65 = scmp.ne.s32.totalorder %s54, %s57
    %p66 = scmp.eq.s32.totalorder %s23, 1
    %p67 = por %p65, %p66
    %p68 = scmp.ne.s32.totalorder %s57, %s58
    %p69 = scmp.eq.s32.totalorder %s23, 0
    %p70 = por %p68, %p69
    %p71 = scmp.ne.s32.totalorder %s57, %s58
    %p72 = scmp.eq.s32.totalorder %s24, 1
    %p73 = por %p71, %p72
    %p75 = scmp.ne.s32.totalorder %s58, %s74
    %p76 = scmp.eq.s32.totalorder %s24, 0
    %p77 = por %p75, %p76
    %s78 = ssub.s32 %s18, %s25
    %p79 = scmp.eq.s32.totalorder %s78, 0
    %s81 = sadd.s32 %s80, 1
    %s82 = scalar_select %p79, %s80, %s81
    %p85 = pneg %p79
    %p86 = scmp.eq.s32.totalorder %s18, 1
    %p87 = por %p85, %p86
    %p88 = scmp.ne.s32.totalorder %s80, %s83
    %p89 = scmp.eq.s32.totalorder %s18, 0
    %p90 = por %p88, %p89
    %p91 = scmp.ne.s32.totalorder %s80, %s83
    %p92 = scmp.eq.s32.totalorder %s23, 1
    %p93 = por %p91, %p92
    %p94 = scmp.ne.s32.totalorder %s83, %s84
    %p95 = scmp.eq.s32.totalorder %s23, 0
    %p96 = por %p94, %p95
    %p97 = scmp.ne.s32.totalorder %s83, %s84
    %p98 = scmp.eq.s32.totalorder %s24, 1
    %p99 = por %p97, %p98
    %p101 = scmp.ne.s32.totalorder %s84, %s100
    %p102 = scmp.eq.s32.totalorder %s24, 0
    %p103 = por %p101, %p102
    %s105 = sadd.s32 %s104, 1
    %p108 = scmp.eq.s32.totalorder %s18, 1
    %p109 = scmp.ne.s32.totalorder %s104, %s106
    %p110 = scmp.eq.s32.totalorder %s18, 0
    %p111 = por %p109, %p110
    %p112 = scmp.ne.s32.totalorder %s104, %s106
    %p113 = scmp.eq.s32.totalorder %s23, 1
    %p114 = por %p112, %p113
    %p115 = scmp.ne.s32.totalorder %s106, %s107
    %p116 = scmp.eq.s32.totalorder %s23, 0
    %p117 = por %p115, %p116
    %p118 = scmp.ne.s32.totalorder %s106, %s107
    %p119 = scmp.eq.s32.totalorder %s24, 1
    %p120 = por %p118, %p119
    %p122 = scmp.ne.s32.totalorder %s107, %s121
    %p123 = scmp.eq.s32.totalorder %s24, 0
    %p124 = por %p122, %p123
    %s126 = sadd.s32 %s125, 1
    %p129 = scmp.eq.s32.totalorder %s18, 1
    %p130 = scmp.ne.s32.totalorder %s125, %s127
    %p131 = scmp.eq.s32.totalorder %s18, 0
    %p132 = por %p130, %p131
    %p133 = scmp.ne.s32.totalorder %s125, %s127
    %p134 = scmp.eq.s32.totalorder %s23, 1
    %p135 = por %p133, %p134
    %p136 = scmp.ne.s32.totalorder %s127, %s128
    %p137 = scmp.eq.s32.totalorder %s23, 0
    %p138 = por %p136, %p137
    %p139 = scmp.ne.s32.totalorder %s127, %s128
    %p140 = scmp.eq.s32.totalorder %s24, 1
    %p141 = por %p139, %p140
    %p143 = scmp.ne.s32.totalorder %s128, %s142
    %p144 = scmp.eq.s32.totalorder %s24, 0
    %p145 = por %p143, %p144
    %s147 = sadd.s32 %s146, 1
    %p150 = scmp.eq.s32.totalorder %s18, 1
    %p151 = scmp.ne.s32.totalorder %s146, %s148
    %p152 = scmp.eq.s32.totalorder %s18, 0
    %p153 = por %p151, %p152
    %p154 = scmp.ne.s32.totalorder %s146, %s148
    %p155 = scmp.eq.s32.totalorder %s23, 1
    %p156 = por %p154, %p155
    %p157 = scmp.ne.s32.totalorder %s148, %s149
    %p158 = scmp.eq.s32.totalorder %s23, 0
    %p159 = por %p157, %p158
    %p160 = scmp.ne.s32.totalorder %s148, %s149
    %p161 = scmp.eq.s32.totalorder %s24, 1
    %p162 = por %p160, %p161
    %p164 = scmp.ne.s32.totalorder %s149, %s163
    %p165 = scmp.eq.s32.totalorder %s24, 0
    %p166 = por %p164, %p165
    %s168 = sadd.s32 %s167, 1
    %p171 = scmp.eq.s32.totalorder %s18, 1
    %p172 = scmp.ne.s32.totalorder %s167, %s169
    %p173 = scmp.eq.s32.totalorder %s18, 0
    %p174 = por %p172, %p173
    %p175 = scmp.ne.s32.totalorder %s167, %s169
    %p176 = scmp.eq.s32.totalorder %s23, 1
    %p177 = por %p175, %p176
    %p178 = scmp.ne.s32.totalorder %s169, %s170
    %p179 = scmp.eq.s32.totalorder %s23, 0
    %p180 = por %p178, %p179
    %p181 = scmp.ne.s32.totalorder %s169, %s170
    %p182 = scmp.eq.s32.totalorder %s24, 1
    %p183 = por %p181, %p182
    %p185 = scmp.ne.s32.totalorder %s170, %s184
    %p186 = scmp.eq.s32.totalorder %s24, 0
    %p187 = por %p185, %p186
    %s189 = sadd.s32 %s188, 1
    %p192 = scmp.eq.s32.totalorder %s18, 1
    %p193 = scmp.ne.s32.totalorder %s188, %s190
    %p194 = scmp.eq.s32.totalorder %s18, 0
    %p195 = por %p193, %p194
    %p196 = scmp.ne.s32.totalorder %s188, %s190
    %p197 = scmp.eq.s32.totalorder %s23, 1
    %p198 = por %p196, %p197
    %p199 = scmp.ne.s32.totalorder %s190, %s191
    %p200 = scmp.eq.s32.totalorder %s23, 0
    %p201 = por %p199, %p200
    %p202 = scmp.ne.s32.totalorder %s190, %s191
    %p203 = scmp.eq.s32.totalorder %s24, 1
    %p204 = por %p202, %p203
    %p206 = scmp.ne.s32.totalorder %s191, %s205
    %p207 = scmp.eq.s32.totalorder %s24, 0
    %p208 = por %p206, %p207
    %s210 = sadd.s32 %s209, 1
    %p213 = scmp.eq.s32.totalorder %s18, 1
    %p214 = scmp.ne.s32.totalorder %s209, %s211
    %p215 = scmp.eq.s32.totalorder %s18, 0
    %p216 = por %p214, %p215
    %p217 = scmp.ne.s32.totalorder %s209, %s211
    %p218 = scmp.eq.s32.totalorder %s23, 1
    %p219 = por %p217, %p218
    %p220 = scmp.ne.s32.totalorder %s211, %s212
    %p221 = scmp.eq.s32.totalorder %s23, 0
    %p222 = por %p220, %p221
    %p223 = scmp.ne.s32.totalorder %s211, %s212
    %p224 = scmp.eq.s32.totalorder %s24, 1
    %p225 = por %p223, %p224
    %p227 = scmp.ne.s32.totalorder %s212, %s226
    %p228 = scmp.eq.s32.totalorder %s24, 0
    %p229 = por %p227, %p228
    %s230 = ssub.s32 %s18, %s25
    %p231 = scmp.eq.s32.totalorder %s230, 0
    %s233 = sadd.s32 %s232, 1
    %s234 = scalar_select %p231, %s232, %s233
    %p237 = pneg %p231
    %p238 = scmp.eq.s32.totalorder %s18, 1
    %p239 = por %p237, %p238
    %p240 = scmp.ne.s32.totalorder %s232, %s235
    %p241 = scmp.eq.s32.totalorder %s18, 0
    %p242 = por %p240, %p241
    %p243 = scmp.ne.s32.totalorder %s232, %s235
    %p244 = scmp.eq.s32.totalorder %s23, 1
    %p245 = por %p243, %p244
    %p246 = scmp.ne.s32.totalorder %s235, %s236
    %p247 = scmp.eq.s32.totalorder %s23, 0
    %p248 = por %p246, %p247
    %p249 = scmp.ne.s32.totalorder %s235, %s236
    %p250 = scmp.eq.s32.totalorder %s24, 1
    %p251 = por %p249, %p250
    %p253 = scmp.ne.s32.totalorder %s236, %s252
    %p254 = scmp.eq.s32.totalorder %s24, 0
    %p255 = por %p253, %p254
    %s256 = ssub.s32 %s18, %s25
    %p257 = scmp.eq.s32.totalorder %s256, 0
    %s259 = sadd.s32 %s258, 1
    %s260 = scalar_select %p257, %s258, %s259
    %p263 = pneg %p257
    %p264 = scmp.eq.s32.totalorder %s18, 1
    %p265 = por %p263, %p264
    %p266 = scmp.ne.s32.totalorder %s258, %s261
    %p267 = scmp.eq.s32.totalorder %s18, 0
    %p268 = por %p266, %p267
    %p269 = scmp.ne.s32.totalorder %s258, %s261
    %p270 = scmp.eq.s32.totalorder %s23, 1
    %p271 = por %p269, %p270
    %p272 = scmp.ne.s32.totalorder %s261, %s262
    %p273 = scmp.eq.s32.totalorder %s23, 0
    %p274 = por %p272, %p273
    %p275 = scmp.ne.s32.totalorder %s261, %s262
    %p276 = scmp.eq.s32.totalorder %s24, 1
    %p277 = por %p275, %p276
    %p279 = scmp.ne.s32.totalorder %s262, %s278
    %p280 = scmp.eq.s32.totalorder %s24, 0
    %p281 = por %p279, %p280
    %s282 = ssub.s32 %s18, %s25
    %p283 = scmp.eq.s32.totalorder %s282, 0
    %s285 = sadd.s32 %s284, 1
    %s286 = scalar_select %p283, %s284, %s285
    %p289 = pneg %p283
    %p290 = scmp.eq.s32.totalorder %s18, 1
    %p291 = por %p289, %p290
    %p292 = scmp.ne.s32.totalorder %s284, %s287
    %p293 = scmp.eq.s32.totalorder %s18, 0
    %p294 = por %p292, %p293
    %p295 = scmp.ne.s32.totalorder %s284, %s287
    %p296 = scmp.eq.s32.totalorder %s23, 1
    %p297 = por %p295, %p296
    %p298 = scmp.ne.s32.totalorder %s287, %s288
    %p299 = scmp.eq.s32.totalorder %s23, 0
    %p300 = por %p298, %p299
    %p301 = scmp.ne.s32.totalorder %s287, %s288
    %p302 = scmp.eq.s32.totalorder %s24, 1
    %p303 = por %p301, %p302
    %p305 = scmp.ne.s32.totalorder %s288, %s304
    %p306 = scmp.eq.s32.totalorder %s24, 0
    %p307 = por %p305, %p306
    %p308 = scmp.le.s32.totalorder 1, %s18
    %p309 = scmp.lt.s32.totalorder %s18, 3
    %p310 = pnand %p308, %p309
    %p311 = pneg %p310
    // Predicated region
    $region9: #{tpu_custom_call.1} parent=5 // pred_check
      _
    $region10: #{tpu_custom_call.1} parent=5 // pred_check_branch
      %313 = sbr.rel (%p310) target = $region12
    $region11: #{tpu_custom_call.1} parent=5 // pred_region
      %s314 = ssub.s32 %s18, 1
      // Predicated region
      $region13: #{tpu_custom_call.1} parent=11 // pred_check
        %p315 = pneg %p117
      $region14: #{tpu_custom_call.1} parent=11 // pred_check_branch
        %317 = sbr.rel (%p315) target = $region16
      $region15: #{tpu_custom_call.1} parent=11 // pred_region
        _
      $region16: #{tpu_custom_call.1} parent=11 // pred_fallthru
        _
      // Predicated region
      $region17: #{tpu_custom_call.1} parent=11 // pred_check
        %p318 = pneg %p138
      $region18: #{tpu_custom_call.1} parent=11 // pred_check_branch
        %320 = sbr.rel (%p318) target = $region20
      $region19: #{tpu_custom_call.1} parent=11 // pred_region
        _
      $region20: #{tpu_custom_call.1} parent=11 // pred_fallthru
        _
      // Predicated region
      $region21: #{tpu_custom_call.1} parent=11 // pred_check
        %p321 = pneg %p159
      $region22: #{tpu_custom_call.1} parent=11 // pred_check_branch
        %323 = sbr.rel (%p321) target = $region24
      $region23: #{tpu_custom_call.1} parent=11 // pred_region
        _
      $region24: #{tpu_custom_call.1} parent=11 // pred_fallthru
        _
      // Predicated region
      $region25: #{tpu_custom_call.1} parent=11 // pred_check
        %p324 = pneg %p180
      $region26: #{tpu_custom_call.1} parent=11 // pred_check_branch
        %326 = sbr.rel (%p324) target = $region28
      $region27: #{tpu_custom_call.1} parent=11 // pred_region
        _
      $region28: #{tpu_custom_call.1} parent=11 // pred_fallthru
        _
      // Predicated region
      $region29: #{tpu_custom_call.1} parent=11 // pred_check
        %p327 = pneg %p201
      $region30: #{tpu_custom_call.1} parent=11 // pred_check_branch
        %329 = sbr.rel (%p327) target = $region32
      $region31: #{tpu_custom_call.1} parent=11 // pred_region
        _
      $region32: #{tpu_custom_call.1} parent=11 // pred_fallthru
        _
      // Predicated region
      $region33: #{tpu_custom_call.1} parent=11 // pred_check
        %p330 = pneg %p222
      $region34: #{tpu_custom_call.1} parent=11 // pred_check_branch
        %332 = sbr.rel (%p330) target = $region36
      $region35: #{tpu_custom_call.1} parent=11 // pred_region
        _
      $region36: #{tpu_custom_call.1} parent=11 // pred_fallthru
        _
    $region12: #{tpu_custom_call.1} parent=5 // pred_fallthru
      _
    %p333 = scmp.lt.s32.totalorder %s18, 2
    // Predicated region
    $region37: #{tpu_custom_call.1} parent=5 // pred_check
      %p334 = pneg %p333
    $region38: #{tpu_custom_call.1} parent=5 // pred_check_branch
      %336 = sbr.rel (%p334) target = $region40
    $region39: #{tpu_custom_call.1} parent=5 // pred_region
      // Predicated region
      $region41: #{tpu_custom_call.1} parent=39 // pred_check
        %p337 = pneg %p38
      $region42: #{tpu_custom_call.1} parent=39 // pred_check_branch
        %339 = sbr.rel (%p337) target = $region44
      $region43: #{tpu_custom_call.1} parent=39 // pred_region
        %p340 = scmp.lt.s32.totalorder %s18, 1
        %s341 = scalar_select %p340, %s18, 1
        %s342 = smul.addr %s341, 2
        %s343 = smul.addr %s342, 4
        %s344 = scalar_lea.vmem %s0, %s343
      $region44: #{tpu_custom_call.1} parent=39 // pred_fallthru
        _
      // Predicated region
      $region45: #{tpu_custom_call.1} parent=39 // pred_check
        %p345 = pneg %p64
      $region46: #{tpu_custom_call.1} parent=39 // pred_check_branch
        %347 = sbr.rel (%p345) target = $region48
      $region47: #{tpu_custom_call.1} parent=39 // pred_region
        %p348 = scmp.lt.s32.totalorder %s18, 1
        %s349 = scalar_select %p348, %s18, 1
        %s350 = smul.addr %s349, 4
        %s351 = scalar_lea.vmem %s1, %s350
      $region48: #{tpu_custom_call.1} parent=39 // pred_fallthru
        _
      // Predicated region
      $region49: #{tpu_custom_call.1} parent=39 // pred_check
        %p352 = pneg %p90
      $region50: #{tpu_custom_call.1} parent=39 // pred_check_branch
        %354 = sbr.rel (%p352) target = $region52
      $region51: #{tpu_custom_call.1} parent=39 // pred_region
        %p355 = scmp.lt.s32.totalorder %s18, 1
        %s356 = scalar_select %p355, %s18, 1
        %s357 = smul.addr %s356, 4
        %s358 = scalar_lea.vmem %s2, %s357
      $region52: #{tpu_custom_call.1} parent=39 // pred_fallthru
        _
    $region40: #{tpu_custom_call.1} parent=5 // pred_fallthru
      _
    %p359 = scmp.le.s32.totalorder 1, %s18
    %p360 = scmp.lt.s32.totalorder %s18, 3
    %p361 = pnand %p359, %p360
    %p362 = pneg %p361
    // Predicated region
    $region53: #{tpu_custom_call.1} parent=5 // pred_check
      _
    $region54: #{tpu_custom_call.1} parent=5 // pred_check_branch
      %364 = sbr.rel (%p361) target = $region56
    $region55: #{tpu_custom_call.1} parent=5 // pred_region
      %s365 = ssub.s32 %s18, 1
      %p366 = scmp.lt.s32.totalorder %s23, 1
      %s367 = scalar_select %p366, %s23, 1
      %s368 = smul.addr %s367, 2
      %s369 = smul.addr %s368, 4
      %s370 = scalar_lea.vmem %s0, %s369
      %p371 = pneg %p44
      %p372 = pneg %p41
      %p373 = scmp.lt.s32.totalorder %s23, 1
      %s374 = scalar_select %p373, %s23, 1
      %s375 = smul.addr %s374, 4
      %s376 = scalar_lea.vmem %s1, %s375
      %p377 = pneg %p70
      %p378 = pneg %p67
      %p379 = scmp.lt.s32.totalorder %s23, 1
      %s380 = scalar_select %p379, %s23, 1
      %s381 = smul.addr %s380, 4
      %s382 = scalar_lea.vmem %s2, %s381
      %p383 = pneg %p96
      %p384 = pneg %p93
      %p385 = pneg %p117
      %p386 = pneg %p114
      %p387 = pneg %p138
      %p388 = pneg %p135
      %p389 = pneg %p159
      %p390 = pneg %p156
      %p391 = pneg %p180
      %p392 = pneg %p177
      %p393 = pneg %p201
      %p394 = pneg %p198
      %p395 = pneg %p222
      %p396 = pneg %p219
      %p397 = pneg %p248
      %p398 = pneg %p245
      %p399 = scmp.lt.s32.totalorder %s23, 1
      %s400 = scalar_select %p399, %s23, 1
      %s401 = smul.addr %s400, 8
      %s402 = smul.addr %s401, 8
      %s403 = scalar_lea.vmem %s9, %s402
      %p404 = pneg %p274
      %p405 = pneg %p271
      %p406 = scmp.lt.s32.totalorder %s23, 1
      %s407 = scalar_select %p406, %s23, 1
      %s408 = smul.addr %s407, 8
      %s409 = smul.addr %s408, 8
      %s410 = scalar_lea.vmem %s10, %s409
      %p411 = pneg %p300
      %p412 = pneg %p297
      %p413 = scmp.lt.s32.totalorder %s23, 1
      %s414 = scalar_select %p413, %s23, 1
      %s415 = smul.addr %s414, 8
      %s416 = smul.addr %s415, 8
      %s417 = scalar_lea.vmem %s11, %s416
      %p418 = scmp.lt.s32.totalorder %s23, 1
      %s419 = scalar_select %p418, %s23, 1
      %s420 = smul.addr %s419, 2
      %s421 = smul.addr %s420, 4
      %s422 = scalar_lea.vmem %s0, %s421
      %p423 = scmp.lt.s32.totalorder %s23, 1
      %s424 = scalar_select %p423, %s23, 1
      %s425 = smul.addr %s424, 4
      %s426 = scalar_lea.vmem %s1, %s425
      %p427 = scmp.lt.s32.totalorder %s23, 1
      %s428 = scalar_select %p427, %s23, 1
      %s429 = smul.addr %s428, 4
      %s430 = scalar_lea.vmem %s2, %s429
      %p431 = scmp.lt.s32.totalorder %s23, 1
      %s432 = scalar_select %p431, %s23, 1
      %s433 = smul.addr %s432, 8
      %s434 = smul.addr %s433, 8
      %s435 = scalar_lea.vmem %s9, %s434
      %p436 = scmp.lt.s32.totalorder %s23, 1
      %s437 = scalar_select %p436, %s23, 1
      %s438 = smul.addr %s437, 8
      %s439 = smul.addr %s438, 8
      %s440 = scalar_lea.vmem %s10, %s439
      %p441 = scmp.lt.s32.totalorder %s23, 1
      %s442 = scalar_select %p441, %s23, 1
      %s443 = smul.addr %s442, 8
      %s444 = smul.addr %s443, 8
      %s445 = scalar_lea.vmem %s11, %s444
      %v447 = vld [vmem:[%s3] sm:$0xf]
      %v448 = vld [vmem:[%s3 + $0x4] sm:$0xf]
      %v449 = vld [vmem:[%s3 + $0x8] sm:$0xf]
      %v450 = vld [vmem:[%s3 + $0xc] sm:$0xf]
      %v451 = vld [vmem:[%s3 + $0x10] sm:$0xf]
      %v452 = vld [vmem:[%s3 + $0x14] sm:$0xf]
      %v453 = vld [vmem:[%s3 + $0x18] sm:$0xf]
      %v454 = vld [vmem:[%s3 + $0x1c] sm:$0xf]
      %v455 = vld [vmem:[%s422] sm:$0xf]
      %v456 = vld [vmem:[%s422 + $0x4] sm:$0xf]
      %v457 = vld [vmem:[%s4] sm:$0xff]
      %v458 = vld [vmem:[%s4 + $0x8] sm:$0xff]
      %v459 = vld [vmem:[%s4 + $0x10] sm:$0xff]
      %v460 = vld [vmem:[%s4 + $0x18] sm:$0xff]
      %v461 = vld [vmem:[%s4 + $0x20] sm:$0xff]
      %v462 = vld [vmem:[%s4 + $0x28] sm:$0xff]
      %v463 = vld [vmem:[%s4 + $0x30] sm:$0xff]
      %v464 = vld [vmem:[%s4 + $0x38] sm:$0xff]
      %466 = vset.pattern.permute.xlu0 0
      %467 = vperm.xlu0 %466, %v457
      %v468 = vpop.permute.xlu0 %467
      %471 = vset.pattern.permute.xlu0 0
      %472 = vperm.xlu0 %471, %v458
      %v473 = vpop.permute.xlu0 %472
      %476 = vset.pattern.permute.xlu0 0
      %477 = vperm.xlu0 %476, %v459
      %v478 = vpop.permute.xlu0 %477
      %481 = vset.pattern.permute.xlu0 0
      %482 = vperm.xlu0 %481, %v460
      %v483 = vpop.permute.xlu0 %482
      %486 = vset.pattern.permute.xlu0 0
      %487 = vperm.xlu0 %486, %v461
      %v488 = vpop.permute.xlu0 %487
      %491 = vset.pattern.permute.xlu0 0
      %492 = vperm.xlu0 %491, %v462
      %v493 = vpop.permute.xlu0 %492
      %496 = vset.pattern.permute.xlu0 0
      %497 = vperm.xlu0 %496, %v463
      %v498 = vpop.permute.xlu0 %497
      %501 = vset.pattern.permute.xlu0 0
      %502 = vperm.xlu0 %501, %v464
      %v503 = vpop.permute.xlu0 %502
      %v513 = vunpack.c.l.b16 %v447
      %v514 = vunpack.c.l.b16 %v448
      %v515 = vunpack.c.l.b16 %v449
      %v516 = vunpack.c.l.b16 %v450
      %v517 = vunpack.c.l.b16 %v451
      %v518 = vunpack.c.l.b16 %v452
      %v519 = vunpack.c.l.b16 %v453
      %v520 = vunpack.c.l.b16 %v454
      %v521 = vpack.c.b16 %v514, %v513
      %v522 = vpack.c.b16 %v516, %v515
      %v523 = vpack.c.b16 %v518, %v517
      %v524 = vpack.c.b16 %v520, %v519
      %v527 = vunpack.c.l.b16 %v455
      %v528 = vunpack.c.l.b16 %v456
      %v529 = vpack.c.b16 %v528, %v527
      %vm530 = vcmask 523264
      %v532 = vsel %vm530, %v521, 0
      %v535 = vsel %vm530, %v522, 0
      %v538 = vsel %vm530, %v523, 0
      %v541 = vsel %vm530, %v524, 0
      %v544 = vsel %vm530, %v529, 0
      %546 = vmatprep.subr.bf16.mxu0 0
      %547 = vmatpush1.bf16.xpose.msra.mxu0 %v544
      %548 = vmatprep.subr.bf16.mxu0 0
      %549 = vmatpush1.bf16.xpose.msra.mxu0 0
      %550 = vmatprep.subr.bf16.mxu0 0
      %551 = vmatpush1.bf16.xpose.msra.mxu0 0
      %552 = vmatprep.subr.bf16.mxu0 0
      %553 = vmatpush1.bf16.xpose.msra.mxu0 0
      %554 = vmatprep.subr.bf16.mxu0 0
      %555 = vmatpush1.bf16.xpose.msra.mxu0 0
      %556 = vmatprep.subr.bf16.mxu0 0
      %557 = vmatpush1.bf16.xpose.msra.mxu0 0
      %558 = vmatprep.subr.bf16.mxu0 0
      %559 = vmatpush1.bf16.xpose.msra.mxu0 0
      %560 = vmatprep.subr.bf16.mxu0 0
      %561 = vmatpush1.bf16.xpose.msra.mxu0 0
      %562 = vmatprep.subr.bf16.mxu0 0
      %563 = vmatpush1.bf16.xpose.msra.mxu0 0
      %564 = vmatprep.subr.bf16.mxu0 0
      %565 = vmatpush1.bf16.xpose.msra.mxu0 0
      %566 = vmatprep.subr.bf16.mxu0 0
      %567 = vmatpush1.bf16.xpose.msra.mxu0 0
      %568 = vmatprep.subr.bf16.mxu0 0
      %569 = vmatpush1.bf16.xpose.msra.mxu0 0
      %570 = vmatprep.subr.bf16.mxu0 0
      %571 = vmatpush1.bf16.xpose.msra.mxu0 0
      %572 = vmatprep.subr.bf16.mxu0 0
      %573 = vmatpush1.bf16.xpose.msra.mxu0 0
      %574 = vmatprep.subr.bf16.mxu0 0
      %575 = vmatpush1.bf16.xpose.msra.mxu0 0
      %576 = vmatprep.subr.bf16.mxu0 0
      %577 = vmatpush1.bf16.xpose.msra.mxu0 0
      %578 = vmatprep.mubr.bf16.mxu0 0
      %579 = vmatmul.mubr.bf16.gmra.mrb[0].mxu0 %v532
      %v580 = vpop.f32.mrb[0].mxu0
      %v581 = vadd.f32 %v468, %v580
      %v582 = vpop.f32.mrb[0].mxu0
      %v583 = vpop.f32.mrb[0].mxu0
      %v584 = vadd.f32 %v473, %v583
      %v585 = vpop.f32.mrb[0].mxu0
      %586 = vmatprep.mubr.bf16.mxu0 0
      %587 = vmatmul.mubr.bf16.gmra.mrb[0].mxu0 %v535
      %v588 = vpop.f32.mrb[0].mxu0
      %v589 = vadd.f32 %v478, %v588
      %v590 = vpop.f32.mrb[0].mxu0
      %v591 = vpop.f32.mrb[0].mxu0
      %v592 = vadd.f32 %v483, %v591
      %v593 = vpop.f32.mrb[0].mxu0
      %594 = vmatprep.mubr.bf16.mxu0 0
      %595 = vmatmul.mubr.bf16.gmra.mrb[0].mxu0 %v538
      %v596 = vpop.f32.mrb[0].mxu0
      %v597 = vadd.f32 %v488, %v596
      %v598 = vpop.f32.mrb[0].mxu0
      %v599 = vpop.f32.mrb[0].mxu0
      %v600 = vadd.f32 %v493, %v599
      %v601 = vpop.f32.mrb[0].mxu0
      %602 = vmatprep.mubr.bf16.mxu0 0
      %603 = vmatmul.mubr.bf16.gmra.mrb[0].mxu0 %v541
      %v604 = vpop.f32.mrb[0].mxu0
      %v605 = vadd.f32 %v498, %v604
      %v606 = vpop.f32.mrb[0].mxu0
      %v607 = vpop.f32.mrb[0].mxu0
      %v608 = vadd.f32 %v503, %v607
      %v609 = vpop.f32.mrb[0].mxu0
      %610 = vdwg.mxu0
      %vm611 = vcmask 130048
      %612 = vst.msk [vmem:[%s435] sm:$0xff] %vm611, %v581
      %613 = vst.msk [vmem:[%s435 + $0x8] sm:$0xff] %vm611, %v584
      %614 = vst.msk [vmem:[%s435 + $0x10] sm:$0xff] %vm611, %v589
      %615 = vst.msk [vmem:[%s435 + $0x18] sm:$0xff] %vm611, %v592
      %616 = vst.msk [vmem:[%s435 + $0x20] sm:$0xff] %vm611, %v597
      %617 = vst.msk [vmem:[%s435 + $0x28] sm:$0xff] %vm611, %v600
      %618 = vst.msk [vmem:[%s435 + $0x30] sm:$0xff] %vm611, %v605
      %619 = vst.msk [vmem:[%s435 + $0x38] sm:$0xff] %vm611, %v608
      %v620 = vld [vmem:[%s5] sm:$0xf]
      %v621 = vld [vmem:[%s5 + $0x4] sm:$0xf]
      %v622 = vld [vmem:[%s5 + $0x8] sm:$0xf]
      %v623 = vld [vmem:[%s5 + $0xc] sm:$0xf]
      %v624 = vld [vmem:[%s5 + $0x10] sm:$0xf]
      %v625 = vld [vmem:[%s5 + $0x14] sm:$0xf]
      %v626 = vld [vmem:[%s5 + $0x18] sm:$0xf]
      %v627 = vld [vmem:[%s5 + $0x1c] sm:$0xf]
      %v628 = vld [vmem:[%s426] sm:$0xf]
      %v629 = vld [vmem:[%s6] sm:$0xff]
      %v630 = vld [vmem:[%s6 + $0x8] sm:$0xff]
      %v631 = vld [vmem:[%s6 + $0x10] sm:$0xff]
      %v632 = vld [vmem:[%s6 + $0x18] sm:$0xff]
      %v633 = vld [vmem:[%s6 + $0x20] sm:$0xff]
      %v634 = vld [vmem:[%s6 + $0x28] sm:$0xff]
      %v635 = vld [vmem:[%s6 + $0x30] sm:$0xff]
      %v636 = vld [vmem:[%s6 + $0x38] sm:$0xff]
      %638 = vset.pattern.permute.xlu0 0
      %639 = vperm.xlu0 %638, %v629
      %v640 = vpop.permute.xlu0 %639
      %643 = vset.pattern.permute.xlu0 0
      %644 = vperm.xlu0 %643, %v630
      %v645 = vpop.permute.xlu0 %644
      %648 = vset.pattern.permute.xlu0 0
      %649 = vperm.xlu0 %648, %v631
      %v650 = vpop.permute.xlu0 %649
      %653 = vset.pattern.permute.xlu0 0
      %654 = vperm.xlu0 %653, %v632
      %v655 = vpop.permute.xlu0 %654
      %658 = vset.pattern.permute.xlu0 0
      %659 = vperm.xlu0 %658, %v633
      %v660 = vpop.permute.xlu0 %659
      %663 = vset.pattern.permute.xlu0 0
      %664 = vperm.xlu0 %663, %v634
      %v665 = vpop.permute.xlu0 %664
      %668 = vset.pattern.permute.xlu0 0
      %669 = vperm.xlu0 %668, %v635
      %v670 = vpop.permute.xlu0 %669
      %673 = vset.pattern.permute.xlu0 0
      %674 = vperm.xlu0 %673, %v636
      %v675 = vpop.permute.xlu0 %674
      %v685 = vunpack.c.l.b16 %v620
      %v686 = vunpack.c.l.b16 %v621
      %v687 = vunpack.c.l.b16 %v622
      %v688 = vunpack.c.l.b16 %v623
      %v689 = vunpack.c.l.b16 %v624
      %v690 = vunpack.c.l.b16 %v625
      %v691 = vunpack.c.l.b16 %v626
      %v692 = vunpack.c.l.b16 %v627
      %v693 = vpack.c.b16 %v686, %v685
      %v694 = vpack.c.b16 %v688, %v687
      %v695 = vpack.c.b16 %v690, %v689
      %v696 = vpack.c.b16 %v692, %v691
      %vm697 = vcmask 392192
      %v699 = vsel %vm697, %v693, 0
      %v702 = vsel %vm697, %v694, 0
      %v705 = vsel %vm697, %v695, 0
      %v708 = vsel %vm697, %v696, 0
      %v711 = vsel %vm697, %v628, 0
      %713 = vmatprep.subr.bf16.mxu0 0
      %714 = vmatpush1.bf16.xpose.msra.mxu0 %v711
      %715 = vmatprep.subr.bf16.mxu0 0
      %716 = vmatpush1.bf16.xpose.msra.mxu0 0
      %717 = vmatprep.subr.bf16.mxu0 0
      %718 = vmatpush1.bf16.xpose.msra.mxu0 0
      %719 = vmatprep.subr.bf16.mxu0 0
      %720 = vmatpush1.bf16.xpose.msra.mxu0 0
      %721 = vmatprep.subr.bf16.mxu0 0
      %722 = vmatpush1.bf16.xpose.msra.mxu0 0
      %723 = vmatprep.subr.bf16.mxu0 0
      %724 = vmatpush1.bf16.xpose.msra.mxu0 0
      %725 = vmatprep.subr.bf16.mxu0 0
      %726 = vmatpush1.bf16.xpose.msra.mxu0 0
      %727 = vmatprep.subr.bf16.mxu0 0
      %728 = vmatpush1.bf16.xpose.msra.mxu0 0
      %729 = vmatprep.subr.bf16.mxu0 0
      %730 = vmatpush1.bf16.xpose.msra.mxu0 0
      %731 = vmatprep.subr.bf16.mxu0 0
      %732 = vmatpush1.bf16.xpose.msra.mxu0 0
      %733 = vmatprep.subr.bf16.mxu0 0
      %734 = vmatpush1.bf16.xpose.msra.mxu0 0
      %735 = vmatprep.subr.bf16.mxu0 0
      %736 = vmatpush1.bf16.xpose.msra.mxu0 0
      %737 = vmatprep.subr.bf16.mxu0 0
      %738 = vmatpush1.bf16.xpose.msra.mxu0 0
      %739 = vmatprep.subr.bf16.mxu0 0
      %740 = vmatpush1.bf16.xpose.msra.mxu0 0
      %741 = vmatprep.subr.bf16.mxu0 0
      %742 = vmatpush1.bf16.xpose.msra.mxu0 0
      %743 = vmatprep.subr.bf16.mxu0 0
      %744 = vmatpush1.bf16.xpose.msra.mxu0 0
      %745 = vmatprep.mubr.bf16.mxu0 0
      %746 = vmatmul.mubr.bf16.gmra.mrb[0].mxu0 %v699
      %v747 = vpop.f32.mrb[0].mxu0
      %v748 = vadd.f32 %v640, %v747
      %v749 = vpop.f32.mrb[0].mxu0
      %v750 = vpop.f32.mrb[0].mxu0
      %v751 = vadd.f32 %v645, %v750
      %v752 = vpop.f32.mrb[0].mxu0
      %753 = vmatprep.mubr.bf16.mxu0 0
      %754 = vmatmul.mubr.bf16.gmra.mrb[0].mxu0 %v702
      %v755 = vpop.f32.mrb[0].mxu0
      %v756 = vadd.f32 %v650, %v755
      %v757 = vpop.f32.mrb[0].mxu0
      %v758 = vpop.f32.mrb[0].mxu0
      %v759 = vadd.f32 %v655, %v758
      %v760 = vpop.f32.mrb[0].mxu0
      %761 = vmatprep.mubr.bf16.mxu0 0
      %762 = vmatmul.mubr.bf16.gmra.mrb[0].mxu0 %v705
      %v763 = vpop.f32.mrb[0].mxu0
      %v764 = vadd.f32 %v660, %v763
      %v765 = vpop.f32.mrb[0].mxu0
      %v766 = vpop.f32.mrb[0].mxu0
      %v767 = vadd.f32 %v665, %v766
      %v768 = vpop.f32.mrb[0].mxu0
      %769 = vmatprep.mubr.bf16.mxu0 0
      %770 = vmatmul.mubr.bf16.gmra.mrb[0].mxu0 %v708
      %v771 = vpop.f32.mrb[0].mxu0
      %v772 = vadd.f32 %v670, %v771
      %v773 = vpop.f32.mrb[0].mxu0
      %v774 = vpop.f32.mrb[0].mxu0
      %v775 = vadd.f32 %v675, %v774
      %v776 = vpop.f32.mrb[0].mxu0
      %777 = vdwg.mxu0
      %vm778 = vcmask 64512
      %779 = vst.msk [vmem:[%s440] sm:$0xff] %vm778, %v748
      %780 = vst.msk [vmem:[%s440 + $0x8] sm:$0xff] %vm778, %v751
      %781 = vst.msk [vmem:[%s440 + $0x10] sm:$0xff] %vm778, %v756
      %782 = vst.msk [vmem:[%s440 + $0x18] sm:$0xff] %vm778, %v759
      %783 = vst.msk [vmem:[%s440 + $0x20] sm:$0xff] %vm778, %v764
      %784 = vst.msk [vmem:[%s440 + $0x28] sm:$0xff] %vm778, %v767
      %785 = vst.msk [vmem:[%s440 + $0x30] sm:$0xff] %vm778, %v772
      %786 = vst.msk [vmem:[%s440 + $0x38] sm:$0xff] %vm778, %v775
      %v787 = vld [vmem:[%s7] sm:$0xf]
      %v788 = vld [vmem:[%s7 + $0x4] sm:$0xf]
      %v789 = vld [vmem:[%s7 + $0x8] sm:$0xf]
      %v790 = vld [vmem:[%s7 + $0xc] sm:$0xf]
      %v791 = vld [vmem:[%s7 + $0x10] sm:$0xf]
      %v792 = vld [vmem:[%s7 + $0x14] sm:$0xf]
      %v793 = vld [vmem:[%s7 + $0x18] sm:$0xf]
      %v794 = vld [vmem:[%s7 + $0x1c] sm:$0xf]
      %v795 = vld [vmem:[%s430] sm:$0xf]
      %v796 = vld [vmem:[%s8] sm:$0xff]
      %v797 = vld [vmem:[%s8 + $0x8] sm:$0xff]
      %v798 = vld [vmem:[%s8 + $0x10] sm:$0xff]
      %v799 = vld [vmem:[%s8 + $0x18] sm:$0xff]
      %v800 = vld [vmem:[%s8 + $0x20] sm:$0xff]
      %v801 = vld [vmem:[%s8 + $0x28] sm:$0xff]
      %v802 = vld [vmem:[%s8 + $0x30] sm:$0xff]
      %v803 = vld [vmem:[%s8 + $0x38] sm:$0xff]
      %805 = vset.pattern.permute.xlu0 0
      %806 = vperm.xlu0 %805, %v796
      %v807 = vpop.permute.xlu0 %806
      %810 = vset.pattern.permute.xlu0 0
      %811 = vperm.xlu0 %810, %v797
      %v812 = vpop.permute.xlu0 %811
      %815 = vset.pattern.permute.xlu0 0
      %816 = vperm.xlu0 %815, %v798
      %v817 = vpop.permute.xlu0 %816
      %820 = vset.pattern.permute.xlu0 0
      %821 = vperm.xlu0 %820, %v799
      %v822 = vpop.permute.xlu0 %821
      %825 = vset.pattern.permute.xlu0 0
      %826 = vperm.xlu0 %825, %v800
      %v827 = vpop.permute.xlu0 %826
      %830 = vset.pattern.permute.xlu0 0
      %831 = vperm.xlu0 %830, %v801
      %v832 = vpop.permute.xlu0 %831
      %835 = vset.pattern.permute.xlu0 0
      %836 = vperm.xlu0 %835, %v802
      %v837 = vpop.permute.xlu0 %836
      %840 = vset.pattern.permute.xlu0 0
      %841 = vperm.xlu0 %840, %v803
      %v842 = vpop.permute.xlu0 %841
      %v852 = vunpack.c.l.b16 %v787
      %v853 = vunpack.c.l.b16 %v788
      %v854 = vunpack.c.l.b16 %v789
      %v855 = vunpack.c.l.b16 %v790
      %v856 = vunpack.c.l.b16 %v791
      %v857 = vunpack.c.l.b16 %v792
      %v858 = vunpack.c.l.b16 %v793
      %v859 = vunpack.c.l.b16 %v794
      %v860 = vpack.c.b16 %v853, %v852
      %v861 = vpack.c.b16 %v855, %v854
      %v862 = vpack.c.b16 %v857, %v856
      %v863 = vpack.c.b16 %v859, %v858
      %vm864 = vcmask 326656
      %v866 = vsel %vm864, %v860, 0
      %v869 = vsel %vm864, %v861, 0
      %v872 = vsel %vm864, %v862, 0
      %v875 = vsel %vm864, %v863, 0
      %v878 = vsel %vm864, %v795, 0
      %880 = vmatprep.subr.bf16.mxu0 0
      %881 = vmatpush1.bf16.xpose.msra.mxu0 %v878
      %882 = vmatprep.subr.bf16.mxu0 0
      %883 = vmatpush1.bf16.xpose.msra.mxu0 0
      %884 = vmatprep.subr.bf16.mxu0 0
      %885 = vmatpush1.bf16.xpose.msra.mxu0 0
      %886 = vmatprep.subr.bf16.mxu0 0
      %887 = vmatpush1.bf16.xpose.msra.mxu0 0
      %888 = vmatprep.subr.bf16.mxu0 0
      %889 = vmatpush1.bf16.xpose.msra.mxu0 0
      %890 = vmatprep.subr.bf16.mxu0 0
      %891 = vmatpush1.bf16.xpose.msra.mxu0 0
      %892 = vmatprep.subr.bf16.mxu0 0
      %893 = vmatpush1.bf16.xpose.msra.mxu0 0
      %894 = vmatprep.subr.bf16.mxu0 0
      %895 = vmatpush1.bf16.xpose.msra.mxu0 0
      %896 = vmatprep.subr.bf16.mxu0 0
      %897 = vmatpush1.bf16.xpose.msra.mxu0 0
      %898 = vmatprep.subr.bf16.mxu0 0
      %899 = vmatpush1.bf16.xpose.msra.mxu0 0
      %900 = vmatprep.subr.bf16.mxu0 0
      %901 = vmatpush1.bf16.xpose.msra.mxu0 0
      %902 = vmatprep.subr.bf16.mxu0 0
      %903 = vmatpush1.bf16.xpose.msra.mxu0 0
      %904 = vmatprep.subr.bf16.mxu0 0
      %905 = vmatpush1.bf16.xpose.msra.mxu0 0
      %906 = vmatprep.subr.bf16.mxu0 0
      %907 = vmatpush1.bf16.xpose.msra.mxu0 0
      %908 = vmatprep.subr.bf16.mxu0 0
      %909 = vmatpush1.bf16.xpose.msra.mxu0 0
      %910 = vmatprep.subr.bf16.mxu0 0
      %911 = vmatpush1.bf16.xpose.msra.mxu0 0
      %912 = vmatprep.mubr.bf16.mxu0 0
      %913 = vmatmul.mubr.bf16.gmra.mrb[0].mxu0 %v866
      %v914 = vpop.f32.mrb[0].mxu0
      %v915 = vadd.f32 %v807, %v914
      %v916 = vpop.f32.mrb[0].mxu0
      %v917 = vpop.f32.mrb[0].mxu0
      %v918 = vadd.f32 %v812, %v917
      %v919 = vpop.f32.mrb[0].mxu0
      %920 = vmatprep.mubr.bf16.mxu0 0
      %921 = vmatmul.mubr.bf16.gmra.mrb[0].mxu0 %v869
      %v922 = vpop.f32.mrb[0].mxu0
      %v923 = vadd.f32 %v817, %v922
      %v924 = vpop.f32.mrb[0].mxu0
      %v925 = vpop.f32.mrb[0].mxu0
      %v926 = vadd.f32 %v822, %v925
      %v927 = vpop.f32.mrb[0].mxu0
      %928 = vmatprep.mubr.bf16.mxu0 0
      %929 = vmatmul.mubr.bf16.gmra.mrb[0].mxu0 %v872
      %v930 = vpop.f32.mrb[0].mxu0
      %v931 = vadd.f32 %v827, %v930
      %v932 = vpop.f32.mrb[0].mxu0
      %v933 = vpop.f32.mrb[0].mxu0
      %v934 = vadd.f32 %v832, %v933
      %v935 = vpop.f32.mrb[0].mxu0
      %936 = vmatprep.mubr.bf16.mxu0 0
      %937 = vmatmul.mubr.bf16.gmra.mrb[0].mxu0 %v875
      %v938 = vpop.f32.mrb[0].mxu0
      %v939 = vadd.f32 %v837, %v938
      %v940 = vpop.f32.mrb[0].mxu0
      %v941 = vpop.f32.mrb[0].mxu0
      %v942 = vadd.f32 %v842, %v941
      %v943 = vpop.f32.mrb[0].mxu0
      %944 = vdwg.mxu0
      %945 = vst.msk [vmem:[%s445] sm:$0xff] %vm778, %v915
      %946 = vst.msk [vmem:[%s445 + $0x8] sm:$0xff] %vm778, %v918
      %947 = vst.msk [vmem:[%s445 + $0x10] sm:$0xff] %vm778, %v923
      %948 = vst.msk [vmem:[%s445 + $0x18] sm:$0xff] %vm778, %v926
      %949 = vst.msk [vmem:[%s445 + $0x20] sm:$0xff] %vm778, %v931
      %950 = vst.msk [vmem:[%s445 + $0x28] sm:$0xff] %vm778, %v934
      %951 = vst.msk [vmem:[%s445 + $0x30] sm:$0xff] %vm778, %v939
      %952 = vst.msk [vmem:[%s445 + $0x38] sm:$0xff] %vm778, %v942
      %p953 = scmp.lt.s32.totalorder %s23, 1
      %s954 = scalar_select %p953, %s23, 1
      %s955 = smul.addr %s954, 8
      %s956 = smul.addr %s955, 8
      %s957 = scalar_lea.vmem %s9, %s956
      %p958 = scmp.lt.s32.totalorder %s23, 1
      %s959 = scalar_select %p958, %s23, 1
      %s960 = smul.addr %s959, 8
      %s961 = smul.addr %s960, 8
      %s962 = scalar_lea.vmem %s10, %s961
      %p963 = scmp.lt.s32.totalorder %s23, 1
      %s964 = scalar_select %p963, %s23, 1
      %s965 = smul.addr %s964, 8
      %s966 = smul.addr %s965, 8
      %s967 = scalar_lea.vmem %s11, %s966
      // Predicated region
      $region57: #{tpu_custom_call.1} parent=55 // pred_check
        %p968 = pneg %p245
      $region58: #{tpu_custom_call.1} parent=55 // pred_check_branch
        %970 = sbr.rel (%p968) target = $region60
      $region59: #{tpu_custom_call.1} parent=55 // pred_region
        _
      $region60: #{tpu_custom_call.1} parent=55 // pred_fallthru
        _
      // Predicated region
      $region61: #{tpu_custom_call.1} parent=55 // pred_check
        %p971 = pneg %p271
      $region62: #{tpu_custom_call.1} parent=55 // pred_check_branch
        %973 = sbr.rel (%p971) target = $region64
      $region63: #{tpu_custom_call.1} parent=55 // pred_region
        _
      $region64: #{tpu_custom_call.1} parent=55 // pred_fallthru
        _
      // Predicated region
      $region65: #{tpu_custom_call.1} parent=55 // pred_check
        %p974 = pneg %p297
      $region66: #{tpu_custom_call.1} parent=55 // pred_check_branch
        %976 = sbr.rel (%p974) target = $region68
      $region67: #{tpu_custom_call.1} parent=55 // pred_region
        _
      $region68: #{tpu_custom_call.1} parent=55 // pred_fallthru
        _
    $region56: #{tpu_custom_call.1} parent=5 // pred_fallthru
      _
    %p977 = scmp.le.s32.totalorder 2, %s18
    // Predicated region
    $region69: #{tpu_custom_call.1} parent=5 // pred_check
      %p978 = pneg %p977
    $region70: #{tpu_custom_call.1} parent=5 // pred_check_branch
      %980 = sbr.rel (%p978) target = $region72
    $region71: #{tpu_custom_call.1} parent=5 // pred_region
      %s981 = ssub.s32 %s18, 2
      // Predicated region
      $region73: #{tpu_custom_call.1} parent=71 // pred_check
        %p982 = pneg %p251
      $region74: #{tpu_custom_call.1} parent=71 // pred_check_branch
        %984 = sbr.rel (%p982) target = $region76
      $region75: #{tpu_custom_call.1} parent=71 // pred_region
        %p985 = scmp.lt.s32.totalorder %s24, 1
        %s986 = scalar_select %p985, %s24, 1
        %s987 = smul.addr %s986, 8
        %s988 = smul.addr %s987, 8
        %s989 = scalar_lea.vmem %s9, %s988
      $region76: #{tpu_custom_call.1} parent=71 // pred_fallthru
        _
      // Predicated region
      $region77: #{tpu_custom_call.1} parent=71 // pred_check
        %p990 = pneg %p277
      $region78: #{tpu_custom_call.1} parent=71 // pred_check_branch
        %992 = sbr.rel (%p990) target = $region80
      $region79: #{tpu_custom_call.1} parent=71 // pred_region
        %p993 = scmp.lt.s32.totalorder %s24, 1
        %s994 = scalar_select %p993, %s24, 1
        %s995 = smul.addr %s994, 8
        %s996 = smul.addr %s995, 8
        %s997 = scalar_lea.vmem %s10, %s996
      $region80: #{tpu_custom_call.1} parent=71 // pred_fallthru
        _
      // Predicated region
      $region81: #{tpu_custom_call.1} parent=71 // pred_check
        %p998 = pneg %p303
      $region82: #{tpu_custom_call.1} parent=71 // pred_check_branch
        %1000 = sbr.rel (%p998) target = $region84
      $region83: #{tpu_custom_call.1} parent=71 // pred_region
        %p1001 = scmp.lt.s32.totalorder %s24, 1
        %s1002 = scalar_select %p1001, %s24, 1
        %s1003 = smul.addr %s1002, 8
        %s1004 = smul.addr %s1003, 8
        %s1005 = scalar_lea.vmem %s11, %s1004
      $region84: #{tpu_custom_call.1} parent=71 // pred_fallthru
        _
    $region72: #{tpu_custom_call.1} parent=5 // pred_fallthru
      _
  $region6: #{tpu_custom_call.1} parent=0 // loop_footer
    %s22 = sadd.s32 1, %s18
  $region7: #{tpu_custom_call.1} parent=0 // loop_footer_branch
    %17 = sbr.rel target = $region3
  $region8: #{tpu_custom_call.1} parent=0 // loop_exit
    _

</llo_original>
